<compile_context>
chip_gen: v7x
topology: tpu7x:2x2x1
jax: 0.10.0
libtpu: 0.0.40
codegen_flags: <defaults>
</compile_context>

<pallas_src>
import functools

import jax
import jax.numpy as jnp
from jax.experimental import pallas as pl
from jax.experimental.pallas import tpu as pltpu

LANES = 128


def _round_up(v, m):
    return ((v + m - 1) // m) * m


def gcn_layer_kernel(a_ref, x_ref, w_ref, b_ref, out_ref, acc_ref, *, activation):
    """One GCNConv tile step: acc[i] += A[i, k] @ (X[k] @ W); epilogue at k == last."""
    k = pl.program_id(1)

    @pl.when(k == 0)
    def _():
        acc_ref[...] = jnp.zeros_like(acc_ref)

    # Feature transform for this block of source nodes (small matmul, MXU, f32 acc).
    z = jnp.dot(x_ref[...], w_ref[...], preferred_element_type=jnp.float32)
    # Neighborhood aggregation for this (row-block, col-block) of A (bf16 MXU, f32 acc).
    acc_ref[...] += jnp.dot(a_ref[...], z.astype(jnp.bfloat16),
                            preferred_element_type=jnp.float32)

    @pl.when(k == pl.num_programs(1) - 1)
    def _():
        h = acc_ref[...] + b_ref[...]
        if activation == "relu":
            h = jnp.maximum(h, 0.0)
        elif activation == "sigmoid":
            # exp and reciprocal both route to the EUP slot (VALU stays free).
            h = pl.reciprocal(1.0 + jnp.exp(-h), approx=True)
        out_ref[...] = h.astype(out_ref.dtype)


def gcn_layer(a, x, w, b, *, activation, out_dtype, tm, tk):
    n_pad = a.shape[0]
    f_in = x.shape[1]
    f_out = w.shape[1]
    grid = (n_pad // tm, n_pad // tk)
    return pl.pallas_call(
        functools.partial(gcn_layer_kernel, activation=activation),
        out_shape=jax.ShapeDtypeStruct((n_pad, f_out), out_dtype),
        grid_spec=pltpu.PrefetchScalarGridSpec(
            num_scalar_prefetch=0,
            grid=grid,
            in_specs=[
                pl.BlockSpec((tm, tk), lambda i, k: (i, k)),        # A tile (streamed)
                pl.BlockSpec((tk, f_in), lambda i, k: (k, 0)),      # X column block
                pl.BlockSpec((f_in, f_out), lambda i, k: (0, 0)),   # W (resident)
                pl.BlockSpec((1, f_out), lambda i, k: (0, 0)),      # bias (resident)
            ],
            out_specs=pl.BlockSpec((tm, f_out), lambda i, k: (i, 0)),
            scratch_shapes=[pltpu.VMEM((tm, f_out), jnp.float32)],
        ),
        compiler_params=pltpu.CompilerParams(
            dimension_semantics=("parallel", "arbitrary"),
            vmem_limit_bytes=32 * 1024 * 1024,
        ),
    )(a, x, w, b)


def normalized_adjacency(edge_index, num_nodes):
    """Dense D^{-1/2}(A + I)D^{-1/2} with A[dst, src] = 1 per edge (PyG gcn_norm)."""
    src, dst = edge_index[0], edge_index[1]
    adj = jnp.zeros((num_nodes, num_nodes), jnp.float32)
    adj = adj.at[dst, src].add(1.0)                       # messages flow src -> dst
    adj = adj + jnp.eye(num_nodes, dtype=jnp.float32)     # add self-loops
    deg = adj.sum(axis=1)
    d_inv_sqrt = jnp.where(deg > 0, 1.0 / jnp.sqrt(deg), 0.0)
    return d_inv_sqrt[:, None] * adj * d_inv_sqrt[None, :]


def _pad2(m, rows, cols):
    return jnp.pad(m, ((0, rows - m.shape[0]), (0, cols - m.shape[1])))


@jax.jit
def gcn_forward(x, edge_index, params):
    n, f = x.shape
    # TODO(synk): cache A per graph instead of rebuilding each call; for large sparse
    # graphs replace the dense A@H with a CSR + scalar-prefetch gather/segment-sum design.
    a = normalized_adjacency(edge_index, n)

    # Tile sizes: lane-aligned, adaptive to N, comfortably inside v7x's 64 MiB VMEM
    # (A tile 512x512 bf16 = 0.5 MiB; total working set ~2-3 MiB with double buffering).
    tile = min(512, _round_up(n, LANES))
    n_pad = _round_up(n, tile)
    a = _pad2(a, n_pad, n_pad).astype(jnp.bfloat16)   # padded cols are zero -> no contribution

    # Pad every feature dim up to 128 lanes -> unmasked, lane-dense vector stores.
    f0 = _round_up(f, LANES)
    f1 = _round_up(params["w1"].shape[1], LANES)
    f2 = _round_up(params["w2"].shape[1], LANES)
    f3 = _round_up(params["w3"].shape[1], LANES)

    xp = _pad2(x, n_pad, f0).astype(jnp.bfloat16)
    w1 = _pad2(params["w1"], f0, f1).astype(jnp.bfloat16)
    w2 = _pad2(params["w2"], f1, f2).astype(jnp.bfloat16)
    w3 = _pad2(params["w3"], f2, f3).astype(jnp.bfloat16)
    b1 = _pad2(params["b1"], 1, f1).astype(jnp.float32)
    b2 = _pad2(params["b2"], 1, f2).astype(jnp.float32)
    b3 = _pad2(params["b3"], 1, f3).astype(jnp.float32)

    # conv1 -> ReLU
    h = gcn_layer(a, xp, w1, b1, activation="relu", out_dtype=jnp.bfloat16, tm=tile, tk=tile)
    # TODO(synk): F.dropout(p=0.5, training=True) is stochastic; forward is eval-mode (identity).
    # conv2 -> ReLU
    h = gcn_layer(a, h, w2, b2, activation="relu", out_dtype=jnp.bfloat16, tm=tile, tk=tile)
    # conv3 -> sigmoid
    h = gcn_layer(a, h, w3, b3, activation="sigmoid", out_dtype=jnp.float32, tm=tile, tk=tile)

    return h[:n, :params["w3"].shape[1]]


def glorot(key, shape):
    limit = jnp.sqrt(6.0 / (shape[0] + shape[1]))
    return jax.random.uniform(key, shape, jnp.float32, -limit, limit)


if __name__ == "__main__":
    key = jax.random.PRNGKey(0)
    N, NUM_FEATURES, HIDDEN = 16, 16, 64   # GCN(num_features=16, hidden_channels=64)
    k_x, k_e1, k_e2, k1, k2, k3 = jax.random.split(key, 6)

    # Node features [N, F]
    x = jax.random.normal(k_x, (N, NUM_FEATURES), jnp.float32)

    # Deterministic random undirected edge list, edge_index shape [2, E]
    E = 24
    src = jax.random.randint(k_e1, (E,), 0, N)
    dst = (src + jax.random.randint(k_e2, (E,), 1, N)) % N
    edge_index = jnp.stack([jnp.concatenate([src, dst]),
                            jnp.concatenate([dst, src])]).astype(jnp.int32)

    # GCNConv params: weight [in, out] (glorot), bias zeros (PyG defaults).
    params = {
        "w1": glorot(k1, (NUM_FEATURES, HIDDEN)),
        "b1": jnp.zeros((1, HIDDEN), jnp.float32),
        "w2": glorot(k2, (HIDDEN, HIDDEN // 2)),
        "b2": jnp.zeros((1, HIDDEN // 2), jnp.float32),
        "w3": glorot(k3, (HIDDEN // 2, 1)),
        "b3": jnp.zeros((1, 1), jnp.float32),
    }

    out = gcn_forward(x, edge_index, params)
    jax.block_until_ready(out)
    assert out.shape == (N, 1) and out.dtype == jnp.float32
    print("KERNEL_OK")
</pallas_src>

<mosaic_0001>
module attributes {stable_mosaic.version = 11 : i64} {
  func.func private @main(%arg0: i32) attributes {dimension_semantics = [#tpu.dimension_semantics<core_parallel>], iteration_bounds = array<i64: 2>, tpu.core_type = #tpu.core_type<sc_scalar_subcore>, window_params = []} {
    return
  }
}

module attributes {stable_mosaic.version = 11 : i64} {
  func.func private @main(%arg0: i32) attributes {dimension_semantics = [#tpu.dimension_semantics<core_parallel>], iteration_bounds = array<i64: 2>, tpu.core_type = #tpu.core_type<sc_scalar_subcore>, window_params = []} {
    return
  }
}

module attributes {stable_mosaic.version = 11 : i64} {
  func.func @gcn_layer_kernel(%arg0: i32, %arg1: i32, %arg2: memref<128x128xbf16, #tpu.memory_space<vmem>>, %arg3: memref<128x128xbf16, #tpu.memory_space<vmem>>, %arg4: memref<128x128xbf16, #tpu.memory_space<vmem>>, %arg5: memref<1x128xf32, #tpu.memory_space<vmem>>, %arg6: memref<128x128xbf16, #tpu.memory_space<vmem>>, %arg7: memref<128x128xf32, #tpu.memory_space<vmem>>) attributes {dimension_semantics = [#tpu.dimension_semantics<parallel>, #tpu.dimension_semantics<arbitrary>], iteration_bounds = array<i64: 1, 1>, scalar_prefetch = 0 : i64, scratch_operands = 1 : i64, tpu.core_type = #tpu.core_type<tc>, window_params = [{transform_indices = @transform_0, window_bounds = array<i64: 128, 128>}, {transform_indices = @transform_1, window_bounds = array<i64: 128, 128>}, {pipeline_mode = #tpu.pipeline_mode<synchronous>, transform_indices = @transform_2, window_bounds = array<i64: 128, 128>}, {pipeline_mode = #tpu.pipeline_mode<synchronous>, transform_indices = @transform_3, window_bounds = array<i64: 1, 128>}, {transform_indices = @transform_4, window_bounds = array<i64: 128, 128>}]} {
    %c0_i32 = arith.constant 0 : i32
    %0 = arith.cmpi eq, %arg1, %c0_i32 : i32
    %1 = arith.extui %0 : i1 to i32
    %c0_i32_0 = arith.constant 0 : i32
    %2 = arith.cmpi ne, %1, %c0_i32_0 : i32
    scf.if %2 {
      %cst_13 = arith.constant 0.000000e+00 : f32
      %15 = vector.broadcast %cst_13 : f32 to vector<128x128xf32>
      %c0_14 = arith.constant 0 : index
      %c0_15 = arith.constant 0 : index
      %16 = vector.load %arg7[%c0_14, %c0_15] : memref<128x128xf32, #tpu.memory_space<vmem>>, vector<128x128xf32>
      tpu.vector_store %arg7[%c0_14, %c0_15], %15 {strides = array<i32>} : memref<128x128xf32, #tpu.memory_space<vmem>>, vector<128x128xf32>,
    } else {
    }
    %c0 = arith.constant 0 : index
    %c0_1 = arith.constant 0 : index
    %3 = vector.load %arg3[%c0, %c0_1] : memref<128x128xbf16, #tpu.memory_space<vmem>>, vector<128x128xbf16>
    %c0_2 = arith.constant 0 : index
    %c0_3 = arith.constant 0 : index
    %4 = vector.load %arg4[%c0_2, %c0_3] : memref<128x128xbf16, #tpu.memory_space<vmem>>, vector<128x128xbf16>
    %cst = arith.constant dense<0.000000e+00> : vector<128x128xf32>
    %5 = tpu.matmul %3, %4, %cst {dimension_numbers = #tpu.dot_dimension_numbers<[1], [0], [0], [1], [0, 0, 1, 1], [], []>} : vector<128x128xbf16>, vector<128x128xbf16>, vector<128x128xf32> -> vector<128x128xf32>
    %c0_4 = arith.constant 0 : index
    %c0_5 = arith.constant 0 : index
    %6 = vector.load %arg7[%c0_4, %c0_5] : memref<128x128xf32, #tpu.memory_space<vmem>>, vector<128x128xf32>
    %c0_6 = arith.constant 0 : index
    %c0_7 = arith.constant 0 : index
    %7 = vector.load %arg2[%c0_6, %c0_7] : memref<128x128xbf16, #tpu.memory_space<vmem>>, vector<128x128xbf16>
    %8 = arith.truncf %5 : vector<128x128xf32> to vector<128x128xbf16>
    %cst_8 = arith.constant dense<0.000000e+00> : vector<128x128xf32>
    %9 = tpu.matmul %7, %8, %cst_8 {dimension_numbers = #tpu.dot_dimension_numbers<[1], [0], [0], [1], [0, 0, 1, 1], [], []>} : vector<128x128xbf16>, vector<128x128xbf16>, vector<128x128xf32> -> vector<128x128xf32>
    %10 = arith.addf %6, %9 : vector<128x128xf32>
    %c0_9 = arith.constant 0 : index
    %c0_10 = arith.constant 0 : index
    %11 = vector.load %arg7[%c0_9, %c0_10] : memref<128x128xf32, #tpu.memory_space<vmem>>, vector<128x128xf32>
    tpu.vector_store %arg7[%c0_9, %c0_10], %10 {strides = array<i32>} : memref<128x128xf32, #tpu.memory_space<vmem>>, vector<128x128xf32>,
    %c0_i32_11 = arith.constant 0 : i32
    %12 = arith.cmpi eq, %arg1, %c0_i32_11 : i32
    %13 = arith.extui %12 : i1 to i32
    %c0_i32_12 = arith.constant 0 : i32
    %14 = arith.cmpi ne, %13, %c0_i32_12 : i32
    scf.if %14 {
      %c0_13 = arith.constant 0 : index
      %c0_14 = arith.constant 0 : index
      %15 = vector.load %arg7[%c0_13, %c0_14] : memref<128x128xf32, #tpu.memory_space<vmem>>, vector<128x128xf32>
      %c0_15 = arith.constant 0 : index
      %c0_16 = arith.constant 0 : index
      %16 = vector.load %arg5[%c0_15, %c0_16] : memref<1x128xf32, #tpu.memory_space<vmem>>, vector<1x128xf32>
      %17 = vector.broadcast %16 : vector<1x128xf32> to vector<128x128xf32>
      %18 = arith.addf %15, %17 : vector<128x128xf32>
      %cst_17 = arith.constant 0.000000e+00 : f32
      %19 = vector.broadcast %cst_17 : f32 to vector<128x128xf32>
      %20 = arith.maximumf %18, %19 : vector<128x128xf32>
      %21 = arith.truncf %20 : vector<128x128xf32> to vector<128x128xbf16>
      %c0_18 = arith.constant 0 : index
      %c0_19 = arith.constant 0 : index
      %22 = vector.load %arg6[%c0_18, %c0_19] : memref<128x128xbf16, #tpu.memory_space<vmem>>, vector<128x128xbf16>
      tpu.vector_store %arg6[%c0_18, %c0_19], %21 {strides = array<i32>} : memref<128x128xbf16, #tpu.memory_space<vmem>>, vector<128x128xbf16>,
    } else {
    }
    return
  }
  func.func @transform_0(%arg0: i32, %arg1: i32) -> (i32, i32) {
    %c0_i32 = arith.constant 0 : i32
    return %arg0, %arg1 : i32, i32
  }
  func.func @transform_1(%arg0: i32, %arg1: i32) -> (i32, i32) {
    %c0_i32 = arith.constant 0 : i32
    %c0_i32_0 = arith.constant 0 : i32
    return %arg1, %c0_i32 : i32, i32
  }
  func.func @transform_2(%arg0: i32, %arg1: i32) -> (i32, i32) {
    %c0_i32 = arith.constant 0 : i32
    %c0_i32_0 = arith.constant 0 : i32
    %c0_i32_1 = arith.constant 0 : i32
    return %c0_i32, %c0_i32_0 : i32, i32
  }
  func.func @transform_3(%arg0: i32, %arg1: i32) -> (i32, i32) {
    %c0_i32 = arith.constant 0 : i32
    %c0_i32_0 = arith.constant 0 : i32
    %c0_i32_1 = arith.constant 0 : i32
    return %c0_i32, %c0_i32_0 : i32, i32
  }
  func.func @transform_4(%arg0: i32, %arg1: i32) -> (i32, i32) {
    %c0_i32 = arith.constant 0 : i32
    %c0_i32_0 = arith.constant 0 : i32
    return %arg0, %c0_i32 : i32, i32
  }
}

module attributes {stable_mosaic.version = 11 : i64} {
  func.func @gcn_layer_kernel(%arg0: i32, %arg1: i32, %arg2: memref<128x128xbf16, #tpu.memory_space<vmem>>, %arg3: memref<128x128xbf16, #tpu.memory_space<vmem>>, %arg4: memref<128x128xbf16, #tpu.memory_space<vmem>>, %arg5: memref<1x128xf32, #tpu.memory_space<vmem>>, %arg6: memref<128x128xf32, #tpu.memory_space<vmem>>, %arg7: memref<128x128xf32, #tpu.memory_space<vmem>>) attributes {dimension_semantics = [#tpu.dimension_semantics<parallel>, #tpu.dimension_semantics<arbitrary>], iteration_bounds = array<i64: 1, 1>, scalar_prefetch = 0 : i64, scratch_operands = 1 : i64, tpu.core_type = #tpu.core_type<tc>, window_params = [{transform_indices = @transform_0, window_bounds = array<i64: 128, 128>}, {transform_indices = @transform_1, window_bounds = array<i64: 128, 128>}, {pipeline_mode = #tpu.pipeline_mode<synchronous>, transform_indices = @transform_2, window_bounds = array<i64: 128, 128>}, {pipeline_mode = #tpu.pipeline_mode<synchronous>, transform_indices = @transform_3, window_bounds = array<i64: 1, 128>}, {transform_indices = @transform_4, window_bounds = array<i64: 128, 128>}]} {
    %c0_i32 = arith.constant 0 : i32
    %0 = arith.cmpi eq, %arg1, %c0_i32 : i32
    %1 = arith.extui %0 : i1 to i32
    %c0_i32_0 = arith.constant 0 : i32
    %2 = arith.cmpi ne, %1, %c0_i32_0 : i32
    scf.if %2 {
      %cst_13 = arith.constant 0.000000e+00 : f32
      %15 = vector.broadcast %cst_13 : f32 to vector<128x128xf32>
      %c0_14 = arith.constant 0 : index
      %c0_15 = arith.constant 0 : index
      %16 = vector.load %arg7[%c0_14, %c0_15] : memref<128x128xf32, #tpu.memory_space<vmem>>, vector<128x128xf32>
      tpu.vector_store %arg7[%c0_14, %c0_15], %15 {strides = array<i32>} : memref<128x128xf32, #tpu.memory_space<vmem>>, vector<128x128xf32>,
    } else {
    }
    %c0 = arith.constant 0 : index
    %c0_1 = arith.constant 0 : index
    %3 = vector.load %arg3[%c0, %c0_1] : memref<128x128xbf16, #tpu.memory_space<vmem>>, vector<128x128xbf16>
    %c0_2 = arith.constant 0 : index
    %c0_3 = arith.constant 0 : index
    %4 = vector.load %arg4[%c0_2, %c0_3] : memref<128x128xbf16, #tpu.memory_space<vmem>>, vector<128x128xbf16>
    %cst = arith.constant dense<0.000000e+00> : vector<128x128xf32>
    %5 = tpu.matmul %3, %4, %cst {dimension_numbers = #tpu.dot_dimension_numbers<[1], [0], [0], [1], [0, 0, 1, 1], [], []>} : vector<128x128xbf16>, vector<128x128xbf16>, vector<128x128xf32> -> vector<128x128xf32>
    %c0_4 = arith.constant 0 : index
    %c0_5 = arith.constant 0 : index
    %6 = vector.load %arg7[%c0_4, %c0_5] : memref<128x128xf32, #tpu.memory_space<vmem>>, vector<128x128xf32>
    %c0_6 = arith.constant 0 : index
    %c0_7 = arith.constant 0 : index
    %7 = vector.load %arg2[%c0_6, %c0_7] : memref<128x128xbf16, #tpu.memory_space<vmem>>, vector<128x128xbf16>
    %8 = arith.truncf %5 : vector<128x128xf32> to vector<128x128xbf16>
    %cst_8 = arith.constant dense<0.000000e+00> : vector<128x128xf32>
    %9 = tpu.matmul %7, %8, %cst_8 {dimension_numbers = #tpu.dot_dimension_numbers<[1], [0], [0], [1], [0, 0, 1, 1], [], []>} : vector<128x128xbf16>, vector<128x128xbf16>, vector<128x128xf32> -> vector<128x128xf32>
    %10 = arith.addf %6, %9 : vector<128x128xf32>
    %c0_9 = arith.constant 0 : index
    %c0_10 = arith.constant 0 : index
    %11 = vector.load %arg7[%c0_9, %c0_10] : memref<128x128xf32, #tpu.memory_space<vmem>>, vector<128x128xf32>
    tpu.vector_store %arg7[%c0_9, %c0_10], %10 {strides = array<i32>} : memref<128x128xf32, #tpu.memory_space<vmem>>, vector<128x128xf32>,
    %c0_i32_11 = arith.constant 0 : i32
    %12 = arith.cmpi eq, %arg1, %c0_i32_11 : i32
    %13 = arith.extui %12 : i1 to i32
    %c0_i32_12 = arith.constant 0 : i32
    %14 = arith.cmpi ne, %13, %c0_i32_12 : i32
    scf.if %14 {
      %c0_13 = arith.constant 0 : index
      %c0_14 = arith.constant 0 : index
      %15 = vector.load %arg7[%c0_13, %c0_14] : memref<128x128xf32, #tpu.memory_space<vmem>>, vector<128x128xf32>
      %c0_15 = arith.constant 0 : index
      %c0_16 = arith.constant 0 : index
      %16 = vector.load %arg5[%c0_15, %c0_16] : memref<1x128xf32, #tpu.memory_space<vmem>>, vector<1x128xf32>
      %17 = vector.broadcast %16 : vector<1x128xf32> to vector<128x128xf32>
      %18 = arith.addf %15, %17 : vector<128x128xf32>
      %cst_17 = arith.constant 0.000000e+00 : f32
      %19 = vector.broadcast %cst_17 : f32 to vector<128x128xf32>
      %20 = arith.subf %19, %18 : vector<128x128xf32>
      %21 = math.exp %20 : vector<128x128xf32>
      %cst_18 = arith.constant 1.000000e+00 : f32
      %22 = vector.broadcast %cst_18 : f32 to vector<128x128xf32>
      %23 = arith.addf %22, %21 : vector<128x128xf32>
      %24 = tpu.reciprocal %23 {approx = true} : vector<128x128xf32> -> vector<128x128xf32>
      %c0_19 = arith.constant 0 : index
      %c0_20 = arith.constant 0 : index
      %25 = vector.load %arg6[%c0_19, %c0_20] : memref<128x128xf32, #tpu.memory_space<vmem>>, vector<128x128xf32>
      tpu.vector_store %arg6[%c0_19, %c0_20], %24 {strides = array<i32>} : memref<128x128xf32, #tpu.memory_space<vmem>>, vector<128x128xf32>,
    } else {
    }
    return
  }
  func.func @transform_0(%arg0: i32, %arg1: i32) -> (i32, i32) {
    %c0_i32 = arith.constant 0 : i32
    return %arg0, %arg1 : i32, i32
  }
  func.func @transform_1(%arg0: i32, %arg1: i32) -> (i32, i32) {
    %c0_i32 = arith.constant 0 : i32
    %c0_i32_0 = arith.constant 0 : i32
    return %arg1, %c0_i32 : i32, i32
  }
  func.func @transform_2(%arg0: i32, %arg1: i32) -> (i32, i32) {
    %c0_i32 = arith.constant 0 : i32
    %c0_i32_0 = arith.constant 0 : i32
    %c0_i32_1 = arith.constant 0 : i32
    return %c0_i32, %c0_i32_0 : i32, i32
  }
  func.func @transform_3(%arg0: i32, %arg1: i32) -> (i32, i32) {
    %c0_i32 = arith.constant 0 : i32
    %c0_i32_0 = arith.constant 0 : i32
    %c0_i32_1 = arith.constant 0 : i32
    return %c0_i32, %c0_i32_0 : i32, i32
  }
  func.func @transform_4(%arg0: i32, %arg1: i32) -> (i32, i32) {
    %c0_i32 = arith.constant 0 : i32
    %c0_i32_0 = arith.constant 0 : i32
    return %arg0, %c0_i32 : i32, i32
  }
}

</mosaic_0001>

<llo_original>
// kernel: gcn_forward.3
$region0: #{gcn_forward.3}
  #allocation0 [shape = 'u32[]', space=smem, size = 0x4, offset = 0x4, fixed_abs, tag = 'smem constant byte address 0x4 - core index']
  #allocation1 [shape = 'u32[144,128]{1,0:T(1,128)}', space=vmem, size = 0x12000, scoped, tag = 'internal scratch']
  #allocation2 [shape = 'f32[128,128]{1,0:T(8,128)}', space=vmem, size = 0x10000, scoped, tag = 'scratch operand']
  %s0 = inlined_call_operand.vmem [shape: bf16[128,128], index: 0, kind: input, shape index: {}]
  %s1 = inlined_call_operand.vmem [shape: bf16[128,128], index: 1, kind: input, shape index: {}]
  %s2 = inlined_call_operand.vmem [shape: bf16[128,128], index: 2, kind: input, shape index: {}]
  %s3 = inlined_call_operand.vmem [shape: f32[1,128], index: 3, kind: input, shape index: {}]
  %s4 = inlined_call_operand.vmem [shape: bf16[128,128], index: 4, kind: output, shape index: {}]
  %s5 = sld [smem:[#allocation0]]
  $region34: #{gcn_forward.3} parent=0
    _
  %s7 = ssub.s32 1, %s5
  %s8 = scalar_select 0, %s7, %s5
  // Predicated region
  $region2: #{gcn_forward.3} parent=0 // pred_check
    _
  $region3: #{gcn_forward.3} parent=0 // pred_check_branch
    %10 = sbr.rel (0) target = $region5
  $region4: #{gcn_forward.3} parent=0 // pred_region
    _
  $region5: #{gcn_forward.3} parent=0 // pred_fallthru
    _
  // Predicated region
  $region6: #{gcn_forward.3} parent=0 // pred_check
    _
  $region7: #{gcn_forward.3} parent=0 // pred_check_branch
    %12 = sbr.rel (0) target = $region9
  $region8: #{gcn_forward.3} parent=0 // pred_region
    _
  $region9: #{gcn_forward.3} parent=0 // pred_fallthru
    _
  // Predicated region
  $region10: #{gcn_forward.3} parent=0 // pred_check
    _
  $region11: #{gcn_forward.3} parent=0 // pred_check_branch
    %14 = sbr.rel (0) target = $region13
  $region12: #{gcn_forward.3} parent=0 // pred_region
    _
  $region13: #{gcn_forward.3} parent=0 // pred_fallthru
    _
  // Predicated region
  $region14: #{gcn_forward.3} parent=0 // pred_check
    _
  $region15: #{gcn_forward.3} parent=0 // pred_check_branch
    %16 = sbr.rel (0) target = $region17
  $region16: #{gcn_forward.3} parent=0 // pred_region
    _
  $region17: #{gcn_forward.3} parent=0 // pred_fallthru
    _
  %p18 = scmp.eq.s32.totalorder 0, 0
  // Predicated region
  $region18: #{gcn_forward.3} parent=0 // pred_check
    %p19 = pneg %p18
  $region19: #{gcn_forward.3} parent=0 // pred_check_branch
    %21 = sbr.rel (%p19) target = $region21
  $region20: #{gcn_forward.3} parent=0 // pred_region
    %22 = vst [vmem:[#allocation2] sm:$0xff] 0.0
    %23 = vst [vmem:[#allocation2 + $0x8] sm:$0xff] 0.0
    %24 = vst [vmem:[#allocation2 + $0x10] sm:$0xff] 0.0
    %25 = vst [vmem:[#allocation2 + $0x18] sm:$0xff] 0.0
    %26 = vst [vmem:[#allocation2 + $0x20] sm:$0xff] 0.0
    %27 = vst [vmem:[#allocation2 + $0x28] sm:$0xff] 0.0
    %28 = vst [vmem:[#allocation2 + $0x30] sm:$0xff] 0.0
    %29 = vst [vmem:[#allocation2 + $0x38] sm:$0xff] 0.0
    %30 = vst [vmem:[#allocation2 + $0x40] sm:$0xff] 0.0
    %31 = vst [vmem:[#allocation2 + $0x48] sm:$0xff] 0.0
    %32 = vst [vmem:[#allocation2 + $0x50] sm:$0xff] 0.0
    %33 = vst [vmem:[#allocation2 + $0x58] sm:$0xff] 0.0
    %34 = vst [vmem:[#allocation2 + $0x60] sm:$0xff] 0.0
    %35 = vst [vmem:[#allocation2 + $0x68] sm:$0xff] 0.0
    %36 = vst [vmem:[#allocation2 + $0x70] sm:$0xff] 0.0
    %37 = vst [vmem:[#allocation2 + $0x78] sm:$0xff] 0.0
  $region21: #{gcn_forward.3} parent=0 // pred_fallthru
    _
  %v38 = vld [vmem:[%s1] sm:$0xf]
  %v39 = vld [vmem:[%s1 + $0x4] sm:$0xf]
  %v40 = vld [vmem:[%s1 + $0x8] sm:$0xf]
  %v41 = vld [vmem:[%s1 + $0xc] sm:$0xf]
  %v42 = vld [vmem:[%s1 + $0x10] sm:$0xf]
  %v43 = vld [vmem:[%s1 + $0x14] sm:$0xf]
  %v44 = vld [vmem:[%s1 + $0x18] sm:$0xf]
  %v45 = vld [vmem:[%s1 + $0x1c] sm:$0xf]
  %v46 = vld [vmem:[%s1 + $0x20] sm:$0xf]
  %v47 = vld [vmem:[%s1 + $0x24] sm:$0xf]
  %v48 = vld [vmem:[%s1 + $0x28] sm:$0xf]
  %v49 = vld [vmem:[%s1 + $0x2c] sm:$0xf]
  %v50 = vld [vmem:[%s1 + $0x30] sm:$0xf]
  %v51 = vld [vmem:[%s1 + $0x34] sm:$0xf]
  %v52 = vld [vmem:[%s1 + $0x38] sm:$0xf]
  %v53 = vld [vmem:[%s1 + $0x3c] sm:$0xf]
  %v54 = vld [vmem:[%s2] sm:$0xf]
  %v55 = vld [vmem:[%s2 + $0x4] sm:$0xf]
  %v56 = vld [vmem:[%s2 + $0x8] sm:$0xf]
  %v57 = vld [vmem:[%s2 + $0xc] sm:$0xf]
  %v58 = vld [vmem:[%s2 + $0x10] sm:$0xf]
  %v59 = vld [vmem:[%s2 + $0x14] sm:$0xf]
  %v60 = vld [vmem:[%s2 + $0x18] sm:$0xf]
  %v61 = vld [vmem:[%s2 + $0x1c] sm:$0xf]
  %v62 = vld [vmem:[%s2 + $0x20] sm:$0xf]
  %v63 = vld [vmem:[%s2 + $0x24] sm:$0xf]
  %v64 = vld [vmem:[%s2 + $0x28] sm:$0xf]
  %v65 = vld [vmem:[%s2 + $0x2c] sm:$0xf]
  %v66 = vld [vmem:[%s2 + $0x30] sm:$0xf]
  %v67 = vld [vmem:[%s2 + $0x34] sm:$0xf]
  %v68 = vld [vmem:[%s2 + $0x38] sm:$0xf]
  %v69 = vld [vmem:[%s2 + $0x3c] sm:$0xf]
  %v86 = vunpack.c.l.b16 %v38
  %v87 = vunpack.c.l.b16 %v39
  %v88 = vunpack.c.l.b16 %v40
  %v89 = vunpack.c.l.b16 %v41
  %v90 = vunpack.c.l.b16 %v42
  %v91 = vunpack.c.l.b16 %v43
  %v92 = vunpack.c.l.b16 %v44
  %v93 = vunpack.c.l.b16 %v45
  %v94 = vunpack.c.l.b16 %v46
  %v95 = vunpack.c.l.b16 %v47
  %v96 = vunpack.c.l.b16 %v48
  %v97 = vunpack.c.l.b16 %v49
  %v98 = vunpack.c.l.b16 %v50
  %v99 = vunpack.c.l.b16 %v51
  %v100 = vunpack.c.l.b16 %v52
  %v101 = vunpack.c.l.b16 %v53
  %v102 = vpack.c.b16 %v87, %v86
  %v103 = vpack.c.b16 %v89, %v88
  %v104 = vpack.c.b16 %v91, %v90
  %v105 = vpack.c.b16 %v93, %v92
  %v106 = vpack.c.b16 %v95, %v94
  %v107 = vpack.c.b16 %v97, %v96
  %v108 = vpack.c.b16 %v99, %v98
  %v109 = vpack.c.b16 %v101, %v100
  %v134 = vunpack.c.l.b16 %v54
  %v135 = vunpack.c.l.b16 %v55
  %v136 = vunpack.c.l.b16 %v56
  %v137 = vunpack.c.l.b16 %v57
  %v138 = vunpack.c.l.b16 %v58
  %v139 = vunpack.c.l.b16 %v59
  %v140 = vunpack.c.l.b16 %v60
  %v141 = vunpack.c.l.b16 %v61
  %v142 = vunpack.c.l.b16 %v62
  %v143 = vunpack.c.l.b16 %v63
  %v144 = vunpack.c.l.b16 %v64
  %v145 = vunpack.c.l.b16 %v65
  %v146 = vunpack.c.l.b16 %v66
  %v147 = vunpack.c.l.b16 %v67
  %v148 = vunpack.c.l.b16 %v68
  %v149 = vunpack.c.l.b16 %v69
  %v150 = vpack.c.b16 %v135, %v134
  %v151 = vpack.c.b16 %v137, %v136
  %v152 = vpack.c.b16 %v139, %v138
  %v153 = vpack.c.b16 %v141, %v140
  %v154 = vpack.c.b16 %v143, %v142
  %v155 = vpack.c.b16 %v145, %v144
  %v156 = vpack.c.b16 %v147, %v146
  %v157 = vpack.c.b16 %v149, %v148
  %166 = vmatprep.subr.bf16.mxu0 0
  %167 = vmatpush1.bf16.msra.mxu0 %v150
  %168 = vmatprep.subr.bf16.mxu0 0
  %169 = vmatpush1.bf16.msra.mxu0 %v151
  %170 = vmatprep.subr.bf16.mxu0 0
  %171 = vmatpush1.bf16.msra.mxu0 %v152
  %172 = vmatprep.subr.bf16.mxu0 0
  %173 = vmatpush1.bf16.msra.mxu0 %v153
  %174 = vmatprep.subr.bf16.mxu0 0
  %175 = vmatpush1.bf16.msra.mxu0 %v154
  %176 = vmatprep.subr.bf16.mxu0 0
  %177 = vmatpush1.bf16.msra.mxu0 %v155
  %178 = vmatprep.subr.bf16.mxu0 0
  %179 = vmatpush1.bf16.msra.mxu0 %v156
  %180 = vmatprep.subr.bf16.mxu0 0
  %181 = vmatpush1.bf16.msra.mxu0 %v157
  %182 = vmatprep.subr.bf16.mxu0 0
  %183 = vmatpush1.bf16.msra.mxu0 0
  %184 = vmatprep.subr.bf16.mxu0 0
  %185 = vmatpush1.bf16.msra.mxu0 0
  %186 = vmatprep.subr.bf16.mxu0 0
  %187 = vmatpush1.bf16.msra.mxu0 0
  %188 = vmatprep.subr.bf16.mxu0 0
  %189 = vmatpush1.bf16.msra.mxu0 0
  %190 = vmatprep.subr.bf16.mxu0 0
  %191 = vmatpush1.bf16.msra.mxu0 0
  %192 = vmatprep.subr.bf16.mxu0 0
  %193 = vmatpush1.bf16.msra.mxu0 0
  %194 = vmatprep.subr.bf16.mxu0 0
  %195 = vmatpush1.bf16.msra.mxu0 0
  %196 = vmatprep.subr.bf16.mxu0 0
  %197 = vmatpush1.bf16.msra.mxu0 0
  %198 = vmatprep.mubr.bf16.mxu0 0
  %199 = vmatmul.mubr.bf16.gmra.mrb[0].mxu0 %v102
  %v200 = vpop.f32.mrb[0].mxu0
  %v201 = vadd.f32 0.0, %v200
  %v202 = vpop.f32.mrb[0].mxu0
  %v203 = vpop.f32.mrb[0].mxu0
  %v204 = vadd.f32 0.0, %v203
  %v205 = vpop.f32.mrb[0].mxu0
  %206 = vmatprep.mubr.bf16.mxu0 0
  %207 = vmatmul.mubr.bf16.gmra.mrb[0].mxu0 %v103
  %v208 = vpop.f32.mrb[0].mxu0
  %v209 = vadd.f32 0.0, %v208
  %v210 = vpop.f32.mrb[0].mxu0
  %v211 = vpop.f32.mrb[0].mxu0
  %v212 = vadd.f32 0.0, %v211
  %v213 = vpop.f32.mrb[0].mxu0
  %214 = vmatprep.mubr.bf16.mxu0 0
  %215 = vmatmul.mubr.bf16.gmra.mrb[0].mxu0 %v104
  %v216 = vpop.f32.mrb[0].mxu0
  %v217 = vadd.f32 0.0, %v216
  %v218 = vpop.f32.mrb[0].mxu0
  %v219 = vpop.f32.mrb[0].mxu0
  %v220 = vadd.f32 0.0, %v219
  %v221 = vpop.f32.mrb[0].mxu0
  %222 = vmatprep.mubr.bf16.mxu0 0
  %223 = vmatmul.mubr.bf16.gmra.mrb[0].mxu0 %v105
  %v224 = vpop.f32.mrb[0].mxu0
  %v225 = vadd.f32 0.0, %v224
  %v226 = vpop.f32.mrb[0].mxu0
  %v227 = vpop.f32.mrb[0].mxu0
  %v228 = vadd.f32 0.0, %v227
  %v229 = vpop.f32.mrb[0].mxu0
  %230 = vmatprep.mubr.bf16.mxu0 0
  %231 = vmatmul.mubr.bf16.gmra.mrb[0].mxu0 %v106
  %v232 = vpop.f32.mrb[0].mxu0
  %v233 = vadd.f32 0.0, %v232
  %v234 = vpop.f32.mrb[0].mxu0
  %v235 = vpop.f32.mrb[0].mxu0
  %v236 = vadd.f32 0.0, %v235
  %v237 = vpop.f32.mrb[0].mxu0
  %238 = vmatprep.mubr.bf16.mxu0 0
  %239 = vmatmul.mubr.bf16.gmra.mrb[0].mxu0 %v107
  %v240 = vpop.f32.mrb[0].mxu0
  %v241 = vadd.f32 0.0, %v240
  %v242 = vpop.f32.mrb[0].mxu0
  %v243 = vpop.f32.mrb[0].mxu0
  %v244 = vadd.f32 0.0, %v243
  %v245 = vpop.f32.mrb[0].mxu0
  %246 = vmatprep.mubr.bf16.mxu0 0
  %247 = vmatmul.mubr.bf16.gmra.mrb[0].mxu0 %v108
  %v248 = vpop.f32.mrb[0].mxu0
  %v249 = vadd.f32 0.0, %v248
  %v250 = vpop.f32.mrb[0].mxu0
  %v251 = vpop.f32.mrb[0].mxu0
  %v252 = vadd.f32 0.0, %v251
  %v253 = vpop.f32.mrb[0].mxu0
  %254 = vmatprep.mubr.bf16.mxu0 0
  %255 = vmatmul.mubr.bf16.gmra.mrb[0].mxu0 %v109
  %v256 = vpop.f32.mrb[0].mxu0
  %v257 = vadd.f32 0.0, %v256
  %v258 = vpop.f32.mrb[0].mxu0
  %v259 = vpop.f32.mrb[0].mxu0
  %v260 = vadd.f32 0.0, %v259
  %v261 = vpop.f32.mrb[0].mxu0
  %262 = vdwg.mxu0
  %v263 = vld [vmem:[#allocation2] sm:$0xff]
  %v264 = vld [vmem:[#allocation2 + $0x8] sm:$0xff]
  %v265 = vld [vmem:[#allocation2 + $0x10] sm:$0xff]
  %v266 = vld [vmem:[#allocation2 + $0x18] sm:$0xff]
  %v267 = vld [vmem:[#allocation2 + $0x20] sm:$0xff]
  %v268 = vld [vmem:[#allocation2 + $0x28] sm:$0xff]
  %v269 = vld [vmem:[#allocation2 + $0x30] sm:$0xff]
  %v270 = vld [vmem:[#allocation2 + $0x38] sm:$0xff]
  %v271 = vld [vmem:[#allocation2 + $0x40] sm:$0xff]
  %v272 = vld [vmem:[#allocation2 + $0x48] sm:$0xff]
  %v273 = vld [vmem:[#allocation2 + $0x50] sm:$0xff]
  %v274 = vld [vmem:[#allocation2 + $0x58] sm:$0xff]
  %v275 = vld [vmem:[#allocation2 + $0x60] sm:$0xff]
  %v276 = vld [vmem:[#allocation2 + $0x68] sm:$0xff]
  %v277 = vld [vmem:[#allocation2 + $0x70] sm:$0xff]
  %v278 = vld [vmem:[#allocation2 + $0x78] sm:$0xff]
  %v279 = vld [vmem:[%s0] sm:$0xf]
  %v280 = vld [vmem:[%s0 + $0x4] sm:$0xf]
  %v281 = vld [vmem:[%s0 + $0x8] sm:$0xf]
  %v282 = vld [vmem:[%s0 + $0xc] sm:$0xf]
  %v283 = vld [vmem:[%s0 + $0x10] sm:$0xf]
  %v284 = vld [vmem:[%s0 + $0x14] sm:$0xf]
  %v285 = vld [vmem:[%s0 + $0x18] sm:$0xf]
  %v286 = vld [vmem:[%s0 + $0x1c] sm:$0xf]
  %v287 = vld [vmem:[%s0 + $0x20] sm:$0xf]
  %v288 = vld [vmem:[%s0 + $0x24] sm:$0xf]
  %v289 = vld [vmem:[%s0 + $0x28] sm:$0xf]
  %v290 = vld [vmem:[%s0 + $0x2c] sm:$0xf]
  %v291 = vld [vmem:[%s0 + $0x30] sm:$0xf]
  %v292 = vld [vmem:[%s0 + $0x34] sm:$0xf]
  %v293 = vld [vmem:[%s0 + $0x38] sm:$0xf]
  %v294 = vld [vmem:[%s0 + $0x3c] sm:$0xf]
  %v295 = vpack.c.bf16 %v204, %v201
  %v296 = vpack.c.bf16 %v212, %v209
  %v297 = vpack.c.bf16 %v220, %v217
  %v298 = vpack.c.bf16 %v228, %v225
  %v299 = vpack.c.bf16 %v236, %v233
  %v300 = vpack.c.bf16 %v244, %v241
  %v301 = vpack.c.bf16 %v252, %v249
  %v302 = vpack.c.bf16 %v260, %v257
  %v319 = vunpack.c.l.b16 %v279
  %v320 = vunpack.c.l.b16 %v280
  %v321 = vunpack.c.l.b16 %v281
  %v322 = vunpack.c.l.b16 %v282
  %v323 = vunpack.c.l.b16 %v283
  %v324 = vunpack.c.l.b16 %v284
  %v325 = vunpack.c.l.b16 %v285
  %v326 = vunpack.c.l.b16 %v286
  %v327 = vunpack.c.l.b16 %v287
  %v328 = vunpack.c.l.b16 %v288
  %v329 = vunpack.c.l.b16 %v289
  %v330 = vunpack.c.l.b16 %v290
  %v331 = vunpack.c.l.b16 %v291
  %v332 = vunpack.c.l.b16 %v292
  %v333 = vunpack.c.l.b16 %v293
  %v334 = vunpack.c.l.b16 %v294
  %v335 = vpack.c.b16 %v320, %v319
  %v336 = vpack.c.b16 %v322, %v321
  %v337 = vpack.c.b16 %v324, %v323
  %v338 = vpack.c.b16 %v326, %v325
  %v339 = vpack.c.b16 %v328, %v327
  %v340 = vpack.c.b16 %v330, %v329
  %v341 = vpack.c.b16 %v332, %v331
  %v342 = vpack.c.b16 %v334, %v333
  %351 = vmatprep.subr.bf16.mxu0 0
  %352 = vmatpush1.bf16.msra.mxu0 %v295
  %353 = vmatprep.subr.bf16.mxu0 0
  %354 = vmatpush1.bf16.msra.mxu0 %v296
  %355 = vmatprep.subr.bf16.mxu0 0
  %356 = vmatpush1.bf16.msra.mxu0 %v297
  %357 = vmatprep.subr.bf16.mxu0 0
  %358 = vmatpush1.bf16.msra.mxu0 %v298
  %359 = vmatprep.subr.bf16.mxu0 0
  %360 = vmatpush1.bf16.msra.mxu0 %v299
  %361 = vmatprep.subr.bf16.mxu0 0
  %362 = vmatpush1.bf16.msra.mxu0 %v300
  %363 = vmatprep.subr.bf16.mxu0 0
  %364 = vmatpush1.bf16.msra.mxu0 %v301
  %365 = vmatprep.subr.bf16.mxu0 0
  %366 = vmatpush1.bf16.msra.mxu0 %v302
  %367 = vmatprep.subr.bf16.mxu0 0
  %368 = vmatpush1.bf16.msra.mxu0 0
  %369 = vmatprep.subr.bf16.mxu0 0
  %370 = vmatpush1.bf16.msra.mxu0 0
  %371 = vmatprep.subr.bf16.mxu0 0
  %372 = vmatpush1.bf16.msra.mxu0 0
  %373 = vmatprep.subr.bf16.mxu0 0
  %374 = vmatpush1.bf16.msra.mxu0 0
  %375 = vmatprep.subr.bf16.mxu0 0
  %376 = vmatpush1.bf16.msra.mxu0 0
  %377 = vmatprep.subr.bf16.mxu0 0
  %378 = vmatpush1.bf16.msra.mxu0 0
  %379 = vmatprep.subr.bf16.mxu0 0
  %380 = vmatpush1.bf16.msra.mxu0 0
  %381 = vmatprep.subr.bf16.mxu0 0
  %382 = vmatpush1.bf16.msra.mxu0 0
  %383 = vmatprep.mubr.bf16.mxu0 0
  %384 = vmatmul.mubr.bf16.gmra.mrb[0].mxu0 %v335
  %v385 = vpop.f32.mrb[0].mxu0
  %v386 = vadd.f32 0.0, %v385
  %v387 = vpop.f32.mrb[0].mxu0
  %v388 = vpop.f32.mrb[0].mxu0
  %v389 = vadd.f32 0.0, %v388
  %v390 = vpop.f32.mrb[0].mxu0
  %391 = vmatprep.mubr.bf16.mxu0 0
  %392 = vmatmul.mubr.bf16.gmra.mrb[0].mxu0 %v336
  %v393 = vpop.f32.mrb[0].mxu0
  %v394 = vadd.f32 0.0, %v393
  %v395 = vpop.f32.mrb[0].mxu0
  %v396 = vpop.f32.mrb[0].mxu0
  %v397 = vadd.f32 0.0, %v396
  %v398 = vpop.f32.mrb[0].mxu0
  %399 = vmatprep.mubr.bf16.mxu0 0
  %400 = vmatmul.mubr.bf16.gmra.mrb[0].mxu0 %v337
  %v401 = vpop.f32.mrb[0].mxu0
  %v402 = vadd.f32 0.0, %v401
  %v403 = vpop.f32.mrb[0].mxu0
  %v404 = vpop.f32.mrb[0].mxu0
  %v405 = vadd.f32 0.0, %v404
  %v406 = vpop.f32.mrb[0].mxu0
  %407 = vmatprep.mubr.bf16.mxu0 0
  %408 = vmatmul.mubr.bf16.gmra.mrb[0].mxu0 %v338
  %v409 = vpop.f32.mrb[0].mxu0
  %v410 = vadd.f32 0.0, %v409
  %v411 = vpop.f32.mrb[0].mxu0
  %v412 = vpop.f32.mrb[0].mxu0
  %v413 = vadd.f32 0.0, %v412
  %v414 = vpop.f32.mrb[0].mxu0
  %415 = vmatprep.mubr.bf16.mxu0 0
  %416 = vmatmul.mubr.bf16.gmra.mrb[0].mxu0 %v339
  %v417 = vpop.f32.mrb[0].mxu0
  %v418 = vadd.f32 0.0, %v417
  %v419 = vpop.f32.mrb[0].mxu0
  %v420 = vpop.f32.mrb[0].mxu0
  %v421 = vadd.f32 0.0, %v420
  %v422 = vpop.f32.mrb[0].mxu0
  %423 = vmatprep.mubr.bf16.mxu0 0
  %424 = vmatmul.mubr.bf16.gmra.mrb[0].mxu0 %v340
  %v425 = vpop.f32.mrb[0].mxu0
  %v426 = vadd.f32 0.0, %v425
  %v427 = vpop.f32.mrb[0].mxu0
  %v428 = vpop.f32.mrb[0].mxu0
  %v429 = vadd.f32 0.0, %v428
  %v430 = vpop.f32.mrb[0].mxu0
  %431 = vmatprep.mubr.bf16.mxu0 0
  %432 = vmatmul.mubr.bf16.gmra.mrb[0].mxu0 %v341
  %v433 = vpop.f32.mrb[0].mxu0
  %v434 = vadd.f32 0.0, %v433
  %v435 = vpop.f32.mrb[0].mxu0
  %v436 = vpop.f32.mrb[0].mxu0
  %v437 = vadd.f32 0.0, %v436
  %v438 = vpop.f32.mrb[0].mxu0
  %439 = vmatprep.mubr.bf16.mxu0 0
  %440 = vmatmul.mubr.bf16.gmra.mrb[0].mxu0 %v342
  %v441 = vpop.f32.mrb[0].mxu0
  %v442 = vadd.f32 0.0, %v441
  %v443 = vpop.f32.mrb[0].mxu0
  %v444 = vpop.f32.mrb[0].mxu0
  %v445 = vadd.f32 0.0, %v444
  %v446 = vpop.f32.mrb[0].mxu0
  %447 = vdwg.mxu0
  %v448 = vadd.f32 %v263, %v386
  %v449 = vadd.f32 %v264, %v389
  %v450 = vadd.f32 %v265, %v394
  %v451 = vadd.f32 %v266, %v397
  %v452 = vadd.f32 %v267, %v402
  %v453 = vadd.f32 %v268, %v405
  %v454 = vadd.f32 %v269, %v410
  %v455 = vadd.f32 %v270, %v413
  %v456 = vadd.f32 %v271, %v418
  %v457 = vadd.f32 %v272, %v421
  %v458 = vadd.f32 %v273, %v426
  %v459 = vadd.f32 %v274, %v429
  %v460 = vadd.f32 %v275, %v434
  %v461 = vadd.f32 %v276, %v437
  %v462 = vadd.f32 %v277, %v442
  %v463 = vadd.f32 %v278, %v445
  %464 = vst [vmem:[#allocation2] sm:$0xff] %v448
  %465 = vst [vmem:[#allocation2 + $0x8] sm:$0xff] %v449
  %466 = vst [vmem:[#allocation2 + $0x10] sm:$0xff] %v450
  %467 = vst [vmem:[#allocation2 + $0x18] sm:$0xff] %v451
  %468 = vst [vmem:[#allocation2 + $0x20] sm:$0xff] %v452
  %469 = vst [vmem:[#allocation2 + $0x28] sm:$0xff] %v453
  %470 = vst [vmem:[#allocation2 + $0x30] sm:$0xff] %v454
  %471 = vst [vmem:[#allocation2 + $0x38] sm:$0xff] %v455
  %472 = vst [vmem:[#allocation2 + $0x40] sm:$0xff] %v456
  %473 = vst [vmem:[#allocation2 + $0x48] sm:$0xff] %v457
  %474 = vst [vmem:[#allocation2 + $0x50] sm:$0xff] %v458
  %475 = vst [vmem:[#allocation2 + $0x58] sm:$0xff] %v459
  %476 = vst [vmem:[#allocation2 + $0x60] sm:$0xff] %v460
  %477 = vst [vmem:[#allocation2 + $0x68] sm:$0xff] %v461
  %478 = vst [vmem:[#allocation2 + $0x70] sm:$0xff] %v462
  %479 = vst [vmem:[#allocation2 + $0x78] sm:$0xff] %v463
  // Predicated region
  $region22: #{gcn_forward.3} parent=0 // pred_check
    %p480 = pneg %p18
  $region23: #{gcn_forward.3} parent=0 // pred_check_branch
    %482 = sbr.rel (%p480) target = $region25
  $region24: #{gcn_forward.3} parent=0 // pred_region
    %v483 = vld [vmem:[#allocation2] sm:$0xff]
    %v484 = vld [vmem:[#allocation2 + $0x8] sm:$0xff]
    %v485 = vld [vmem:[#allocation2 + $0x10] sm:$0xff]
    %v486 = vld [vmem:[#allocation2 + $0x18] sm:$0xff]
    %v487 = vld [vmem:[#allocation2 + $0x20] sm:$0xff]
    %v488 = vld [vmem:[#allocation2 + $0x28] sm:$0xff]
    %v489 = vld [vmem:[#allocation2 + $0x30] sm:$0xff]
    %v490 = vld [vmem:[#allocation2 + $0x38] sm:$0xff]
    %v491 = vld [vmem:[#allocation2 + $0x40] sm:$0xff]
    %v492 = vld [vmem:[#allocation2 + $0x48] sm:$0xff]
    %v493 = vld [vmem:[#allocation2 + $0x50] sm:$0xff]
    %v494 = vld [vmem:[#allocation2 + $0x58] sm:$0xff]
    %v495 = vld [vmem:[#allocation2 + $0x60] sm:$0xff]
    %v496 = vld [vmem:[#allocation2 + $0x68] sm:$0xff]
    %v497 = vld [vmem:[#allocation2 + $0x70] sm:$0xff]
    %v498 = vld [vmem:[#allocation2 + $0x78] sm:$0xff]
    %v499 = vld [vmem:[%s3] sm:$0x1]
    %v501 = vlaneseq
    %v502 = vshrl.u32 %v501, 7
    %v503 = vsub.s32 0, %v502
    %v504 = vrot.slane %v499, %v503
    %v506 = vadd.f32 %v483, %v504
    %v507 = vadd.f32 %v484, %v504
    %v508 = vadd.f32 %v485, %v504
    %v509 = vadd.f32 %v486, %v504
    %v510 = vadd.f32 %v487, %v504
    %v511 = vadd.f32 %v488, %v504
    %v512 = vadd.f32 %v489, %v504
    %v513 = vadd.f32 %v490, %v504
    %v514 = vadd.f32 %v491, %v504
    %v515 = vadd.f32 %v492, %v504
    %v516 = vadd.f32 %v493, %v504
    %v517 = vadd.f32 %v494, %v504
    %v518 = vadd.f32 %v495, %v504
    %v519 = vadd.f32 %v496, %v504
    %v520 = vadd.f32 %v497, %v504
    %v521 = vadd.f32 %v498, %v504
    %v522 = vmax.f32 %v506, 0.0
    %v523 = vmax.f32 %v507, 0.0
    %v524 = vmax.f32 %v508, 0.0
    %v525 = vmax.f32 %v509, 0.0
    %v526 = vmax.f32 %v510, 0.0
    %v527 = vmax.f32 %v511, 0.0
    %v528 = vmax.f32 %v512, 0.0
    %v529 = vmax.f32 %v513, 0.0
    %v530 = vmax.f32 %v514, 0.0
    %v531 = vmax.f32 %v515, 0.0
    %v532 = vmax.f32 %v516, 0.0
    %v533 = vmax.f32 %v517, 0.0
    %v534 = vmax.f32 %v518, 0.0
    %v535 = vmax.f32 %v519, 0.0
    %v536 = vmax.f32 %v520, 0.0
    %v537 = vmax.f32 %v521, 0.0
    %v538 = vpack.c.bf16 %v523, %v522
    %v539 = vpack.c.bf16 %v525, %v524
    %v540 = vpack.c.bf16 %v527, %v526
    %v541 = vpack.c.bf16 %v529, %v528
    %v542 = vpack.c.bf16 %v531, %v530
    %v543 = vpack.c.bf16 %v533, %v532
    %v544 = vpack.c.bf16 %v535, %v534
    %v545 = vpack.c.bf16 %v537, %v536
    %v554 = vunpack.c.l.b16 %v538
    %v555 = vunpack.c.h.b16 %v538
    %v556 = vunpack.c.l.b16 %v539
    %v557 = vunpack.c.h.b16 %v539
    %v558 = vunpack.c.l.b16 %v540
    %v559 = vunpack.c.h.b16 %v540
    %v560 = vunpack.c.l.b16 %v541
    %v561 = vunpack.c.h.b16 %v541
    %v562 = vunpack.c.l.b16 %v542
    %v563 = vunpack.c.h.b16 %v542
    %v564 = vunpack.c.l.b16 %v543
    %v565 = vunpack.c.h.b16 %v543
    %v566 = vunpack.c.l.b16 %v544
    %v567 = vunpack.c.h.b16 %v544
    %v568 = vunpack.c.l.b16 %v545
    %v569 = vunpack.c.h.b16 %v545
    %v570 = vpack.c.b16 %v554, %v554
    %v571 = vpack.c.b16 %v555, %v555
    %v572 = vpack.c.b16 %v556, %v556
    %v573 = vpack.c.b16 %v557, %v557
    %v574 = vpack.c.b16 %v558, %v558
    %v575 = vpack.c.b16 %v559, %v559
    %v576 = vpack.c.b16 %v560, %v560
    %v577 = vpack.c.b16 %v561, %v561
    %v578 = vpack.c.b16 %v562, %v562
    %v579 = vpack.c.b16 %v563, %v563
    %v580 = vpack.c.b16 %v564, %v564
    %v581 = vpack.c.b16 %v565, %v565
    %v582 = vpack.c.b16 %v566, %v566
    %v583 = vpack.c.b16 %v567, %v567
    %v584 = vpack.c.b16 %v568, %v568
    %v585 = vpack.c.b16 %v569, %v569
    %602 = vst [vmem:[%s4] sm:$0xf] %v570
    %603 = vst [vmem:[%s4 + $0x4] sm:$0xf] %v571
    %604 = vst [vmem:[%s4 + $0x8] sm:$0xf] %v572
    %605 = vst [vmem:[%s4 + $0xc] sm:$0xf] %v573
    %606 = vst [vmem:[%s4 + $0x10] sm:$0xf] %v574
    %607 = vst [vmem:[%s4 + $0x14] sm:$0xf] %v575
    %608 = vst [vmem:[%s4 + $0x18] sm:$0xf] %v576
    %609 = vst [vmem:[%s4 + $0x1c] sm:$0xf] %v577
    %610 = vst [vmem:[%s4 + $0x20] sm:$0xf] %v578
    %611 = vst [vmem:[%s4 + $0x24] sm:$0xf] %v579
    %612 = vst [vmem:[%s4 + $0x28] sm:$0xf] %v580
    %613 = vst [vmem:[%s4 + $0x2c] sm:$0xf] %v581
    %614 = vst [vmem:[%s4 + $0x30] sm:$0xf] %v582
    %615 = vst [vmem:[%s4 + $0x34] sm:$0xf] %v583
    %616 = vst [vmem:[%s4 + $0x38] sm:$0xf] %v584
    %617 = vst [vmem:[%s4 + $0x3c] sm:$0xf] %v585
  $region25: #{gcn_forward.3} parent=0 // pred_fallthru
    _
  // Predicated region
  $region26: #{gcn_forward.3} parent=0 // pred_check
    _
  $region27: #{gcn_forward.3} parent=0 // pred_check_branch
    %619 = sbr.rel (0) target = $region29
  $region28: #{gcn_forward.3} parent=0 // pred_region
    _
  $region29: #{gcn_forward.3} parent=0 // pred_fallthru
    _
  // Predicated region
  $region30: #{gcn_forward.3} parent=0 // pred_check
    _
  $region31: #{gcn_forward.3} parent=0 // pred_check_branch
    %621 = sbr.rel (0) target = $region33
  $region32: #{gcn_forward.3} parent=0 // pred_region
    _
  $region33: #{gcn_forward.3} parent=0 // pred_fallthru
    _

// kernel: gcn_forward.5
$region0: #{gcn_forward.5}
  #allocation0 [shape = 'u32[]', space=smem, size = 0x4, offset = 0x4, fixed_abs, tag = 'smem constant byte address 0x4 - core index']
  #allocation1 [shape = 'u32[144,128]{1,0:T(1,128)}', space=vmem, size = 0x12000, scoped, tag = 'internal scratch']
  #allocation2 [shape = 'f32[128,128]{1,0:T(8,128)}', space=vmem, size = 0x10000, scoped, tag = 'scratch operand']
  %s0 = inlined_call_operand.vmem [shape: bf16[128,128], index: 0, kind: input, shape index: {}]
  %s1 = inlined_call_operand.vmem [shape: bf16[128,128], index: 1, kind: input, shape index: {}]
  %s2 = inlined_call_operand.vmem [shape: bf16[128,128], index: 2, kind: input, shape index: {}]
  %s3 = inlined_call_operand.vmem [shape: f32[1,128], index: 3, kind: input, shape index: {}]
  %s4 = inlined_call_operand.vmem [shape: f32[128,128], index: 4, kind: output, shape index: {}]
  %s5 = sld [smem:[#allocation0]]
  $region34: #{gcn_forward.5} parent=0
    _
  %s7 = ssub.s32 1, %s5
  %s8 = scalar_select 0, %s7, %s5
  // Predicated region
  $region2: #{gcn_forward.5} parent=0 // pred_check
    _
  $region3: #{gcn_forward.5} parent=0 // pred_check_branch
    %10 = sbr.rel (0) target = $region5
  $region4: #{gcn_forward.5} parent=0 // pred_region
    _
  $region5: #{gcn_forward.5} parent=0 // pred_fallthru
    _
  // Predicated region
  $region6: #{gcn_forward.5} parent=0 // pred_check
    _
  $region7: #{gcn_forward.5} parent=0 // pred_check_branch
    %12 = sbr.rel (0) target = $region9
  $region8: #{gcn_forward.5} parent=0 // pred_region
    _
  $region9: #{gcn_forward.5} parent=0 // pred_fallthru
    _
  // Predicated region
  $region10: #{gcn_forward.5} parent=0 // pred_check
    _
  $region11: #{gcn_forward.5} parent=0 // pred_check_branch
    %14 = sbr.rel (0) target = $region13
  $region12: #{gcn_forward.5} parent=0 // pred_region
    _
  $region13: #{gcn_forward.5} parent=0 // pred_fallthru
    _
  // Predicated region
  $region14: #{gcn_forward.5} parent=0 // pred_check
    _
  $region15: #{gcn_forward.5} parent=0 // pred_check_branch
    %16 = sbr.rel (0) target = $region17
  $region16: #{gcn_forward.5} parent=0 // pred_region
    _
  $region17: #{gcn_forward.5} parent=0 // pred_fallthru
    _
  %p18 = scmp.eq.s32.totalorder 0, 0
  // Predicated region
  $region18: #{gcn_forward.5} parent=0 // pred_check
    %p19 = pneg %p18
  $region19: #{gcn_forward.5} parent=0 // pred_check_branch
    %21 = sbr.rel (%p19) target = $region21
  $region20: #{gcn_forward.5} parent=0 // pred_region
    %22 = vst [vmem:[#allocation2] sm:$0xff] 0.0
    %23 = vst [vmem:[#allocation2 + $0x8] sm:$0xff] 0.0
    %24 = vst [vmem:[#allocation2 + $0x10] sm:$0xff] 0.0
    %25 = vst [vmem:[#allocation2 + $0x18] sm:$0xff] 0.0
    %26 = vst [vmem:[#allocation2 + $0x20] sm:$0xff] 0.0
    %27 = vst [vmem:[#allocation2 + $0x28] sm:$0xff] 0.0
    %28 = vst [vmem:[#allocation2 + $0x30] sm:$0xff] 0.0
    %29 = vst [vmem:[#allocation2 + $0x38] sm:$0xff] 0.0
    %30 = vst [vmem:[#allocation2 + $0x40] sm:$0xff] 0.0
    %31 = vst [vmem:[#allocation2 + $0x48] sm:$0xff] 0.0
    %32 = vst [vmem:[#allocation2 + $0x50] sm:$0xff] 0.0
    %33 = vst [vmem:[#allocation2 + $0x58] sm:$0xff] 0.0
    %34 = vst [vmem:[#allocation2 + $0x60] sm:$0xff] 0.0
    %35 = vst [vmem:[#allocation2 + $0x68] sm:$0xff] 0.0
    %36 = vst [vmem:[#allocation2 + $0x70] sm:$0xff] 0.0
    %37 = vst [vmem:[#allocation2 + $0x78] sm:$0xff] 0.0
  $region21: #{gcn_forward.5} parent=0 // pred_fallthru
    _
  %v38 = vld [vmem:[%s1] sm:$0xf]
  %v39 = vld [vmem:[%s1 + $0x4] sm:$0xf]
  %v40 = vld [vmem:[%s1 + $0x8] sm:$0xf]
  %v41 = vld [vmem:[%s1 + $0xc] sm:$0xf]
  %v42 = vld [vmem:[%s1 + $0x10] sm:$0xf]
  %v43 = vld [vmem:[%s1 + $0x14] sm:$0xf]
  %v44 = vld [vmem:[%s1 + $0x18] sm:$0xf]
  %v45 = vld [vmem:[%s1 + $0x1c] sm:$0xf]
  %v46 = vld [vmem:[%s1 + $0x20] sm:$0xf]
  %v47 = vld [vmem:[%s1 + $0x24] sm:$0xf]
  %v48 = vld [vmem:[%s1 + $0x28] sm:$0xf]
  %v49 = vld [vmem:[%s1 + $0x2c] sm:$0xf]
  %v50 = vld [vmem:[%s1 + $0x30] sm:$0xf]
  %v51 = vld [vmem:[%s1 + $0x34] sm:$0xf]
  %v52 = vld [vmem:[%s1 + $0x38] sm:$0xf]
  %v53 = vld [vmem:[%s1 + $0x3c] sm:$0xf]
  %v54 = vld [vmem:[%s2] sm:$0xf]
  %v55 = vld [vmem:[%s2 + $0x4] sm:$0xf]
  %v56 = vld [vmem:[%s2 + $0x8] sm:$0xf]
  %v57 = vld [vmem:[%s2 + $0xc] sm:$0xf]
  %v58 = vld [vmem:[%s2 + $0x10] sm:$0xf]
  %v59 = vld [vmem:[%s2 + $0x14] sm:$0xf]
  %v60 = vld [vmem:[%s2 + $0x18] sm:$0xf]
  %v61 = vld [vmem:[%s2 + $0x1c] sm:$0xf]
  %v62 = vld [vmem:[%s2 + $0x20] sm:$0xf]
  %v63 = vld [vmem:[%s2 + $0x24] sm:$0xf]
  %v64 = vld [vmem:[%s2 + $0x28] sm:$0xf]
  %v65 = vld [vmem:[%s2 + $0x2c] sm:$0xf]
  %v66 = vld [vmem:[%s2 + $0x30] sm:$0xf]
  %v67 = vld [vmem:[%s2 + $0x34] sm:$0xf]
  %v68 = vld [vmem:[%s2 + $0x38] sm:$0xf]
  %v69 = vld [vmem:[%s2 + $0x3c] sm:$0xf]
  %v86 = vunpack.c.l.b16 %v38
  %v87 = vunpack.c.l.b16 %v39
  %v88 = vunpack.c.l.b16 %v40
  %v89 = vunpack.c.l.b16 %v41
  %v90 = vunpack.c.l.b16 %v42
  %v91 = vunpack.c.l.b16 %v43
  %v92 = vunpack.c.l.b16 %v44
  %v93 = vunpack.c.l.b16 %v45
  %v94 = vunpack.c.l.b16 %v46
  %v95 = vunpack.c.l.b16 %v47
  %v96 = vunpack.c.l.b16 %v48
  %v97 = vunpack.c.l.b16 %v49
  %v98 = vunpack.c.l.b16 %v50
  %v99 = vunpack.c.l.b16 %v51
  %v100 = vunpack.c.l.b16 %v52
  %v101 = vunpack.c.l.b16 %v53
  %v102 = vpack.c.b16 %v87, %v86
  %v103 = vpack.c.b16 %v89, %v88
  %v104 = vpack.c.b16 %v91, %v90
  %v105 = vpack.c.b16 %v93, %v92
  %v106 = vpack.c.b16 %v95, %v94
  %v107 = vpack.c.b16 %v97, %v96
  %v108 = vpack.c.b16 %v99, %v98
  %v109 = vpack.c.b16 %v101, %v100
  %v134 = vunpack.c.l.b16 %v54
  %v135 = vunpack.c.l.b16 %v55
  %v136 = vunpack.c.l.b16 %v56
  %v137 = vunpack.c.l.b16 %v57
  %v138 = vunpack.c.l.b16 %v58
  %v139 = vunpack.c.l.b16 %v59
  %v140 = vunpack.c.l.b16 %v60
  %v141 = vunpack.c.l.b16 %v61
  %v142 = vunpack.c.l.b16 %v62
  %v143 = vunpack.c.l.b16 %v63
  %v144 = vunpack.c.l.b16 %v64
  %v145 = vunpack.c.l.b16 %v65
  %v146 = vunpack.c.l.b16 %v66
  %v147 = vunpack.c.l.b16 %v67
  %v148 = vunpack.c.l.b16 %v68
  %v149 = vunpack.c.l.b16 %v69
  %v150 = vpack.c.b16 %v135, %v134
  %v151 = vpack.c.b16 %v137, %v136
  %v152 = vpack.c.b16 %v139, %v138
  %v153 = vpack.c.b16 %v141, %v140
  %v154 = vpack.c.b16 %v143, %v142
  %v155 = vpack.c.b16 %v145, %v144
  %v156 = vpack.c.b16 %v147, %v146
  %v157 = vpack.c.b16 %v149, %v148
  %166 = vmatprep.subr.bf16.mxu0 0
  %167 = vmatpush1.bf16.msra.mxu0 %v150
  %168 = vmatprep.subr.bf16.mxu0 0
  %169 = vmatpush1.bf16.msra.mxu0 %v151
  %170 = vmatprep.subr.bf16.mxu0 0
  %171 = vmatpush1.bf16.msra.mxu0 %v152
  %172 = vmatprep.subr.bf16.mxu0 0
  %173 = vmatpush1.bf16.msra.mxu0 %v153
  %174 = vmatprep.subr.bf16.mxu0 0
  %175 = vmatpush1.bf16.msra.mxu0 %v154
  %176 = vmatprep.subr.bf16.mxu0 0
  %177 = vmatpush1.bf16.msra.mxu0 %v155
  %178 = vmatprep.subr.bf16.mxu0 0
  %179 = vmatpush1.bf16.msra.mxu0 %v156
  %180 = vmatprep.subr.bf16.mxu0 0
  %181 = vmatpush1.bf16.msra.mxu0 %v157
  %182 = vmatprep.subr.bf16.mxu0 0
  %183 = vmatpush1.bf16.msra.mxu0 0
  %184 = vmatprep.subr.bf16.mxu0 0
  %185 = vmatpush1.bf16.msra.mxu0 0
  %186 = vmatprep.subr.bf16.mxu0 0
  %187 = vmatpush1.bf16.msra.mxu0 0
  %188 = vmatprep.subr.bf16.mxu0 0
  %189 = vmatpush1.bf16.msra.mxu0 0
  %190 = vmatprep.subr.bf16.mxu0 0
  %191 = vmatpush1.bf16.msra.mxu0 0
  %192 = vmatprep.subr.bf16.mxu0 0
  %193 = vmatpush1.bf16.msra.mxu0 0
  %194 = vmatprep.subr.bf16.mxu0 0
  %195 = vmatpush1.bf16.msra.mxu0 0
  %196 = vmatprep.subr.bf16.mxu0 0
  %197 = vmatpush1.bf16.msra.mxu0 0
  %198 = vmatprep.mubr.bf16.mxu0 0
  %199 = vmatmul.mubr.bf16.gmra.mrb[0].mxu0 %v102
  %v200 = vpop.f32.mrb[0].mxu0
  %v201 = vadd.f32 0.0, %v200
  %v202 = vpop.f32.mrb[0].mxu0
  %v203 = vpop.f32.mrb[0].mxu0
  %v204 = vadd.f32 0.0, %v203
  %v205 = vpop.f32.mrb[0].mxu0
  %206 = vmatprep.mubr.bf16.mxu0 0
  %207 = vmatmul.mubr.bf16.gmra.mrb[0].mxu0 %v103
  %v208 = vpop.f32.mrb[0].mxu0
  %v209 = vadd.f32 0.0, %v208
  %v210 = vpop.f32.mrb[0].mxu0
  %v211 = vpop.f32.mrb[0].mxu0
  %v212 = vadd.f32 0.0, %v211
  %v213 = vpop.f32.mrb[0].mxu0
  %214 = vmatprep.mubr.bf16.mxu0 0
  %215 = vmatmul.mubr.bf16.gmra.mrb[0].mxu0 %v104
  %v216 = vpop.f32.mrb[0].mxu0
  %v217 = vadd.f32 0.0, %v216
  %v218 = vpop.f32.mrb[0].mxu0
  %v219 = vpop.f32.mrb[0].mxu0
  %v220 = vadd.f32 0.0, %v219
  %v221 = vpop.f32.mrb[0].mxu0
  %222 = vmatprep.mubr.bf16.mxu0 0
  %223 = vmatmul.mubr.bf16.gmra.mrb[0].mxu0 %v105
  %v224 = vpop.f32.mrb[0].mxu0
  %v225 = vadd.f32 0.0, %v224
  %v226 = vpop.f32.mrb[0].mxu0
  %v227 = vpop.f32.mrb[0].mxu0
  %v228 = vadd.f32 0.0, %v227
  %v229 = vpop.f32.mrb[0].mxu0
  %230 = vmatprep.mubr.bf16.mxu0 0
  %231 = vmatmul.mubr.bf16.gmra.mrb[0].mxu0 %v106
  %v232 = vpop.f32.mrb[0].mxu0
  %v233 = vadd.f32 0.0, %v232
  %v234 = vpop.f32.mrb[0].mxu0
  %v235 = vpop.f32.mrb[0].mxu0
  %v236 = vadd.f32 0.0, %v235
  %v237 = vpop.f32.mrb[0].mxu0
  %238 = vmatprep.mubr.bf16.mxu0 0
  %239 = vmatmul.mubr.bf16.gmra.mrb[0].mxu0 %v107
  %v240 = vpop.f32.mrb[0].mxu0
  %v241 = vadd.f32 0.0, %v240
  %v242 = vpop.f32.mrb[0].mxu0
  %v243 = vpop.f32.mrb[0].mxu0
  %v244 = vadd.f32 0.0, %v243
  %v245 = vpop.f32.mrb[0].mxu0
  %246 = vmatprep.mubr.bf16.mxu0 0
  %247 = vmatmul.mubr.bf16.gmra.mrb[0].mxu0 %v108
  %v248 = vpop.f32.mrb[0].mxu0
  %v249 = vadd.f32 0.0, %v248
  %v250 = vpop.f32.mrb[0].mxu0
  %v251 = vpop.f32.mrb[0].mxu0
  %v252 = vadd.f32 0.0, %v251
  %v253 = vpop.f32.mrb[0].mxu0
  %254 = vmatprep.mubr.bf16.mxu0 0
  %255 = vmatmul.mubr.bf16.gmra.mrb[0].mxu0 %v109
  %v256 = vpop.f32.mrb[0].mxu0
  %v257 = vadd.f32 0.0, %v256
  %v258 = vpop.f32.mrb[0].mxu0
  %v259 = vpop.f32.mrb[0].mxu0
  %v260 = vadd.f32 0.0, %v259
  %v261 = vpop.f32.mrb[0].mxu0
  %262 = vdwg.mxu0
  %v263 = vld [vmem:[#allocation2] sm:$0xff]
  %v264 = vld [vmem:[#allocation2 + $0x8] sm:$0xff]
  %v265 = vld [vmem:[#allocation2 + $0x10] sm:$0xff]
  %v266 = vld [vmem:[#allocation2 + $0x18] sm:$0xff]
  %v267 = vld [vmem:[#allocation2 + $0x20] sm:$0xff]
  %v268 = vld [vmem:[#allocation2 + $0x28] sm:$0xff]
  %v269 = vld [vmem:[#allocation2 + $0x30] sm:$0xff]
  %v270 = vld [vmem:[#allocation2 + $0x38] sm:$0xff]
  %v271 = vld [vmem:[#allocation2 + $0x40] sm:$0xff]
  %v272 = vld [vmem:[#allocation2 + $0x48] sm:$0xff]
  %v273 = vld [vmem:[#allocation2 + $0x50] sm:$0xff]
  %v274 = vld [vmem:[#allocation2 + $0x58] sm:$0xff]
  %v275 = vld [vmem:[#allocation2 + $0x60] sm:$0xff]
  %v276 = vld [vmem:[#allocation2 + $0x68] sm:$0xff]
  %v277 = vld [vmem:[#allocation2 + $0x70] sm:$0xff]
  %v278 = vld [vmem:[#allocation2 + $0x78] sm:$0xff]
  %v279 = vld [vmem:[%s0] sm:$0xf]
  %v280 = vld [vmem:[%s0 + $0x4] sm:$0xf]
  %v281 = vld [vmem:[%s0 + $0x8] sm:$0xf]
  %v282 = vld [vmem:[%s0 + $0xc] sm:$0xf]
  %v283 = vld [vmem:[%s0 + $0x10] sm:$0xf]
  %v284 = vld [vmem:[%s0 + $0x14] sm:$0xf]
  %v285 = vld [vmem:[%s0 + $0x18] sm:$0xf]
  %v286 = vld [vmem:[%s0 + $0x1c] sm:$0xf]
  %v287 = vld [vmem:[%s0 + $0x20] sm:$0xf]
  %v288 = vld [vmem:[%s0 + $0x24] sm:$0xf]
  %v289 = vld [vmem:[%s0 + $0x28] sm:$0xf]
  %v290 = vld [vmem:[%s0 + $0x2c] sm:$0xf]
  %v291 = vld [vmem:[%s0 + $0x30] sm:$0xf]
  %v292 = vld [vmem:[%s0 + $0x34] sm:$0xf]
  %v293 = vld [vmem:[%s0 + $0x38] sm:$0xf]
  %v294 = vld [vmem:[%s0 + $0x3c] sm:$0xf]
  %v295 = vpack.c.bf16 %v204, %v201
  %v296 = vpack.c.bf16 %v212, %v209
  %v297 = vpack.c.bf16 %v220, %v217
  %v298 = vpack.c.bf16 %v228, %v225
  %v299 = vpack.c.bf16 %v236, %v233
  %v300 = vpack.c.bf16 %v244, %v241
  %v301 = vpack.c.bf16 %v252, %v249
  %v302 = vpack.c.bf16 %v260, %v257
  %v319 = vunpack.c.l.b16 %v279
  %v320 = vunpack.c.l.b16 %v280
  %v321 = vunpack.c.l.b16 %v281
  %v322 = vunpack.c.l.b16 %v282
  %v323 = vunpack.c.l.b16 %v283
  %v324 = vunpack.c.l.b16 %v284
  %v325 = vunpack.c.l.b16 %v285
  %v326 = vunpack.c.l.b16 %v286
  %v327 = vunpack.c.l.b16 %v287
  %v328 = vunpack.c.l.b16 %v288
  %v329 = vunpack.c.l.b16 %v289
  %v330 = vunpack.c.l.b16 %v290
  %v331 = vunpack.c.l.b16 %v291
  %v332 = vunpack.c.l.b16 %v292
  %v333 = vunpack.c.l.b16 %v293
  %v334 = vunpack.c.l.b16 %v294
  %v335 = vpack.c.b16 %v320, %v319
  %v336 = vpack.c.b16 %v322, %v321
  %v337 = vpack.c.b16 %v324, %v323
  %v338 = vpack.c.b16 %v326, %v325
  %v339 = vpack.c.b16 %v328, %v327
  %v340 = vpack.c.b16 %v330, %v329
  %v341 = vpack.c.b16 %v332, %v331
  %v342 = vpack.c.b16 %v334, %v333
  %351 = vmatprep.subr.bf16.mxu0 0
  %352 = vmatpush1.bf16.msra.mxu0 %v295
  %353 = vmatprep.subr.bf16.mxu0 0
  %354 = vmatpush1.bf16.msra.mxu0 %v296
  %355 = vmatprep.subr.bf16.mxu0 0
  %356 = vmatpush1.bf16.msra.mxu0 %v297
  %357 = vmatprep.subr.bf16.mxu0 0
  %358 = vmatpush1.bf16.msra.mxu0 %v298
  %359 = vmatprep.subr.bf16.mxu0 0
  %360 = vmatpush1.bf16.msra.mxu0 %v299
  %361 = vmatprep.subr.bf16.mxu0 0
  %362 = vmatpush1.bf16.msra.mxu0 %v300
  %363 = vmatprep.subr.bf16.mxu0 0
  %364 = vmatpush1.bf16.msra.mxu0 %v301
  %365 = vmatprep.subr.bf16.mxu0 0
  %366 = vmatpush1.bf16.msra.mxu0 %v302
  %367 = vmatprep.subr.bf16.mxu0 0
  %368 = vmatpush1.bf16.msra.mxu0 0
  %369 = vmatprep.subr.bf16.mxu0 0
  %370 = vmatpush1.bf16.msra.mxu0 0
  %371 = vmatprep.subr.bf16.mxu0 0
  %372 = vmatpush1.bf16.msra.mxu0 0
  %373 = vmatprep.subr.bf16.mxu0 0
  %374 = vmatpush1.bf16.msra.mxu0 0
  %375 = vmatprep.subr.bf16.mxu0 0
  %376 = vmatpush1.bf16.msra.mxu0 0
  %377 = vmatprep.subr.bf16.mxu0 0
  %378 = vmatpush1.bf16.msra.mxu0 0
  %379 = vmatprep.subr.bf16.mxu0 0
  %380 = vmatpush1.bf16.msra.mxu0 0
  %381 = vmatprep.subr.bf16.mxu0 0
  %382 = vmatpush1.bf16.msra.mxu0 0
  %383 = vmatprep.mubr.bf16.mxu0 0
  %384 = vmatmul.mubr.bf16.gmra.mrb[0].mxu0 %v335
  %v385 = vpop.f32.mrb[0].mxu0
  %v386 = vadd.f32 0.0, %v385
  %v387 = vpop.f32.mrb[0].mxu0
  %v388 = vpop.f32.mrb[0].mxu0
  %v389 = vadd.f32 0.0, %v388
  %v390 = vpop.f32.mrb[0].mxu0
  %391 = vmatprep.mubr.bf16.mxu0 0
  %392 = vmatmul.mubr.bf16.gmra.mrb[0].mxu0 %v336
  %v393 = vpop.f32.mrb[0].mxu0
  %v394 = vadd.f32 0.0, %v393
  %v395 = vpop.f32.mrb[0].mxu0
  %v396 = vpop.f32.mrb[0].mxu0
  %v397 = vadd.f32 0.0, %v396
  %v398 = vpop.f32.mrb[0].mxu0
  %399 = vmatprep.mubr.bf16.mxu0 0
  %400 = vmatmul.mubr.bf16.gmra.mrb[0].mxu0 %v337
  %v401 = vpop.f32.mrb[0].mxu0
  %v402 = vadd.f32 0.0, %v401
  %v403 = vpop.f32.mrb[0].mxu0
  %v404 = vpop.f32.mrb[0].mxu0
  %v405 = vadd.f32 0.0, %v404
  %v406 = vpop.f32.mrb[0].mxu0
  %407 = vmatprep.mubr.bf16.mxu0 0
  %408 = vmatmul.mubr.bf16.gmra.mrb[0].mxu0 %v338
  %v409 = vpop.f32.mrb[0].mxu0
  %v410 = vadd.f32 0.0, %v409
  %v411 = vpop.f32.mrb[0].mxu0
  %v412 = vpop.f32.mrb[0].mxu0
  %v413 = vadd.f32 0.0, %v412
  %v414 = vpop.f32.mrb[0].mxu0
  %415 = vmatprep.mubr.bf16.mxu0 0
  %416 = vmatmul.mubr.bf16.gmra.mrb[0].mxu0 %v339
  %v417 = vpop.f32.mrb[0].mxu0
  %v418 = vadd.f32 0.0, %v417
  %v419 = vpop.f32.mrb[0].mxu0
  %v420 = vpop.f32.mrb[0].mxu0
  %v421 = vadd.f32 0.0, %v420
  %v422 = vpop.f32.mrb[0].mxu0
  %423 = vmatprep.mubr.bf16.mxu0 0
  %424 = vmatmul.mubr.bf16.gmra.mrb[0].mxu0 %v340
  %v425 = vpop.f32.mrb[0].mxu0
  %v426 = vadd.f32 0.0, %v425
  %v427 = vpop.f32.mrb[0].mxu0
  %v428 = vpop.f32.mrb[0].mxu0
  %v429 = vadd.f32 0.0, %v428
  %v430 = vpop.f32.mrb[0].mxu0
  %431 = vmatprep.mubr.bf16.mxu0 0
  %432 = vmatmul.mubr.bf16.gmra.mrb[0].mxu0 %v341
  %v433 = vpop.f32.mrb[0].mxu0
  %v434 = vadd.f32 0.0, %v433
  %v435 = vpop.f32.mrb[0].mxu0
  %v436 = vpop.f32.mrb[0].mxu0
  %v437 = vadd.f32 0.0, %v436
  %v438 = vpop.f32.mrb[0].mxu0
  %439 = vmatprep.mubr.bf16.mxu0 0
  %440 = vmatmul.mubr.bf16.gmra.mrb[0].mxu0 %v342
  %v441 = vpop.f32.mrb[0].mxu0
  %v442 = vadd.f32 0.0, %v441
  %v443 = vpop.f32.mrb[0].mxu0
  %v444 = vpop.f32.mrb[0].mxu0
  %v445 = vadd.f32 0.0, %v444
  %v446 = vpop.f32.mrb[0].mxu0
  %447 = vdwg.mxu0
  %v448 = vadd.f32 %v263, %v386
  %v449 = vadd.f32 %v264, %v389
  %v450 = vadd.f32 %v265, %v394
  %v451 = vadd.f32 %v266, %v397
  %v452 = vadd.f32 %v267, %v402
  %v453 = vadd.f32 %v268, %v405
  %v454 = vadd.f32 %v269, %v410
  %v455 = vadd.f32 %v270, %v413
  %v456 = vadd.f32 %v271, %v418
  %v457 = vadd.f32 %v272, %v421
  %v458 = vadd.f32 %v273, %v426
  %v459 = vadd.f32 %v274, %v429
  %v460 = vadd.f32 %v275, %v434
  %v461 = vadd.f32 %v276, %v437
  %v462 = vadd.f32 %v277, %v442
  %v463 = vadd.f32 %v278, %v445
  %464 = vst [vmem:[#allocation2] sm:$0xff] %v448
  %465 = vst [vmem:[#allocation2 + $0x8] sm:$0xff] %v449
  %466 = vst [vmem:[#allocation2 + $0x10] sm:$0xff] %v450
  %467 = vst [vmem:[#allocation2 + $0x18] sm:$0xff] %v451
  %468 = vst [vmem:[#allocation2 + $0x20] sm:$0xff] %v452
  %469 = vst [vmem:[#allocation2 + $0x28] sm:$0xff] %v453
  %470 = vst [vmem:[#allocation2 + $0x30] sm:$0xff] %v454
  %471 = vst [vmem:[#allocation2 + $0x38] sm:$0xff] %v455
  %472 = vst [vmem:[#allocation2 + $0x40] sm:$0xff] %v456
  %473 = vst [vmem:[#allocation2 + $0x48] sm:$0xff] %v457
  %474 = vst [vmem:[#allocation2 + $0x50] sm:$0xff] %v458
  %475 = vst [vmem:[#allocation2 + $0x58] sm:$0xff] %v459
  %476 = vst [vmem:[#allocation2 + $0x60] sm:$0xff] %v460
  %477 = vst [vmem:[#allocation2 + $0x68] sm:$0xff] %v461
  %478 = vst [vmem:[#allocation2 + $0x70] sm:$0xff] %v462
  %479 = vst [vmem:[#allocation2 + $0x78] sm:$0xff] %v463
  // Predicated region
  $region22: #{gcn_forward.5} parent=0 // pred_check
    %p480 = pneg %p18
  $region23: #{gcn_forward.5} parent=0 // pred_check_branch
    %482 = sbr.rel (%p480) target = $region25
  $region24: #{gcn_forward.5} parent=0 // pred_region
    %v483 = vld [vmem:[#allocation2] sm:$0xff]
    %v484 = vld [vmem:[#allocation2 + $0x8] sm:$0xff]
    %v485 = vld [vmem:[#allocation2 + $0x10] sm:$0xff]
    %v486 = vld [vmem:[#allocation2 + $0x18] sm:$0xff]
    %v487 = vld [vmem:[#allocation2 + $0x20] sm:$0xff]
    %v488 = vld [vmem:[#allocation2 + $0x28] sm:$0xff]
    %v489 = vld [vmem:[#allocation2 + $0x30] sm:$0xff]
    %v490 = vld [vmem:[#allocation2 + $0x38] sm:$0xff]
    %v491 = vld [vmem:[#allocation2 + $0x40] sm:$0xff]
    %v492 = vld [vmem:[#allocation2 + $0x48] sm:$0xff]
    %v493 = vld [vmem:[#allocation2 + $0x50] sm:$0xff]
    %v494 = vld [vmem:[#allocation2 + $0x58] sm:$0xff]
    %v495 = vld [vmem:[#allocation2 + $0x60] sm:$0xff]
    %v496 = vld [vmem:[#allocation2 + $0x68] sm:$0xff]
    %v497 = vld [vmem:[#allocation2 + $0x70] sm:$0xff]
    %v498 = vld [vmem:[#allocation2 + $0x78] sm:$0xff]
    %v499 = vld [vmem:[%s3] sm:$0x1]
    %v501 = vlaneseq
    %v502 = vshrl.u32 %v501, 7
    %v503 = vsub.s32 0, %v502
    %v504 = vrot.slane %v499, %v503
    %v506 = vadd.f32 %v483, %v504
    %v507 = vadd.f32 %v484, %v504
    %v508 = vadd.f32 %v485, %v504
    %v509 = vadd.f32 %v486, %v504
    %v510 = vadd.f32 %v487, %v504
    %v511 = vadd.f32 %v488, %v504
    %v512 = vadd.f32 %v489, %v504
    %v513 = vadd.f32 %v490, %v504
    %v514 = vadd.f32 %v491, %v504
    %v515 = vadd.f32 %v492, %v504
    %v516 = vadd.f32 %v493, %v504
    %v517 = vadd.f32 %v494, %v504
    %v518 = vadd.f32 %v495, %v504
    %v519 = vadd.f32 %v496, %v504
    %v520 = vadd.f32 %v497, %v504
    %v521 = vadd.f32 %v498, %v504
    %v522 = vsub.f32 0.0, %v506
    %v523 = vsub.f32 0.0, %v507
    %v524 = vsub.f32 0.0, %v508
    %v525 = vsub.f32 0.0, %v509
    %v526 = vsub.f32 0.0, %v510
    %v527 = vsub.f32 0.0, %v511
    %v528 = vsub.f32 0.0, %v512
    %v529 = vsub.f32 0.0, %v513
    %v530 = vsub.f32 0.0, %v514
    %v531 = vsub.f32 0.0, %v515
    %v532 = vsub.f32 0.0, %v516
    %v533 = vsub.f32 0.0, %v517
    %v534 = vsub.f32 0.0, %v518
    %v535 = vsub.f32 0.0, %v519
    %v536 = vsub.f32 0.0, %v520
    %v537 = vsub.f32 0.0, %v521
    %v538 = vmul.f32 %v522, 1.442695
    %v539 = vpow.pop %v538
    %v540 = vmul.f32 %v523, 1.442695
    %v541 = vpow.pop %v540
    %v542 = vmul.f32 %v524, 1.442695
    %v543 = vpow.pop %v542
    %v544 = vmul.f32 %v525, 1.442695
    %v545 = vpow.pop %v544
    %v546 = vmul.f32 %v526, 1.442695
    %v547 = vpow.pop %v546
    %v548 = vmul.f32 %v527, 1.442695
    %v549 = vpow.pop %v548
    %v550 = vmul.f32 %v528, 1.442695
    %v551 = vpow.pop %v550
    %v552 = vmul.f32 %v529, 1.442695
    %v553 = vpow.pop %v552
    %v554 = vmul.f32 %v530, 1.442695
    %v555 = vpow.pop %v554
    %v556 = vmul.f32 %v531, 1.442695
    %v557 = vpow.pop %v556
    %v558 = vmul.f32 %v532, 1.442695
    %v559 = vpow.pop %v558
    %v560 = vmul.f32 %v533, 1.442695
    %v561 = vpow.pop %v560
    %v562 = vmul.f32 %v534, 1.442695
    %v563 = vpow.pop %v562
    %v564 = vmul.f32 %v535, 1.442695
    %v565 = vpow.pop %v564
    %v566 = vmul.f32 %v536, 1.442695
    %v567 = vpow.pop %v566
    %v568 = vmul.f32 %v537, 1.442695
    %v569 = vpow.pop %v568
    %v570 = vadd.f32 %v539, 1.0
    %v571 = vadd.f32 %v541, 1.0
    %v572 = vadd.f32 %v543, 1.0
    %v573 = vadd.f32 %v545, 1.0
    %v574 = vadd.f32 %v547, 1.0
    %v575 = vadd.f32 %v549, 1.0
    %v576 = vadd.f32 %v551, 1.0
    %v577 = vadd.f32 %v553, 1.0
    %v578 = vadd.f32 %v555, 1.0
    %v579 = vadd.f32 %v557, 1.0
    %v580 = vadd.f32 %v559, 1.0
    %v581 = vadd.f32 %v561, 1.0
    %v582 = vadd.f32 %v563, 1.0
    %v583 = vadd.f32 %v565, 1.0
    %v584 = vadd.f32 %v567, 1.0
    %v585 = vadd.f32 %v569, 1.0
    %v586 = vrcp.pop %v570
    %v587 = vrcp.pop %v571
    %v588 = vrcp.pop %v572
    %v589 = vrcp.pop %v573
    %v590 = vrcp.pop %v574
    %v591 = vrcp.pop %v575
    %v592 = vrcp.pop %v576
    %v593 = vrcp.pop %v577
    %v594 = vrcp.pop %v578
    %v595 = vrcp.pop %v579
    %v596 = vrcp.pop %v580
    %v597 = vrcp.pop %v581
    %v598 = vrcp.pop %v582
    %v599 = vrcp.pop %v583
    %v600 = vrcp.pop %v584
    %v601 = vrcp.pop %v585
    %602 = vst [vmem:[%s4] sm:$0xff] %v586
    %603 = vst [vmem:[%s4 + $0x8] sm:$0xff] %v587
    %604 = vst [vmem:[%s4 + $0x10] sm:$0xff] %v588
    %605 = vst [vmem:[%s4 + $0x18] sm:$0xff] %v589
    %606 = vst [vmem:[%s4 + $0x20] sm:$0xff] %v590
    %607 = vst [vmem:[%s4 + $0x28] sm:$0xff] %v591
    %608 = vst [vmem:[%s4 + $0x30] sm:$0xff] %v592
    %609 = vst [vmem:[%s4 + $0x38] sm:$0xff] %v593
    %610 = vst [vmem:[%s4 + $0x40] sm:$0xff] %v594
    %611 = vst [vmem:[%s4 + $0x48] sm:$0xff] %v595
    %612 = vst [vmem:[%s4 + $0x50] sm:$0xff] %v596
    %613 = vst [vmem:[%s4 + $0x58] sm:$0xff] %v597
    %614 = vst [vmem:[%s4 + $0x60] sm:$0xff] %v598
    %615 = vst [vmem:[%s4 + $0x68] sm:$0xff] %v599
    %616 = vst [vmem:[%s4 + $0x70] sm:$0xff] %v600
    %617 = vst [vmem:[%s4 + $0x78] sm:$0xff] %v601
  $region25: #{gcn_forward.5} parent=0 // pred_fallthru
    _
  // Predicated region
  $region26: #{gcn_forward.5} parent=0 // pred_check
    _
  $region27: #{gcn_forward.5} parent=0 // pred_check_branch
    %619 = sbr.rel (0) target = $region29
  $region28: #{gcn_forward.5} parent=0 // pred_region
    _
  $region29: #{gcn_forward.5} parent=0 // pred_fallthru
    _
  // Predicated region
  $region30: #{gcn_forward.5} parent=0 // pred_check
    _
  $region31: #{gcn_forward.5} parent=0 // pred_check_branch
    %621 = sbr.rel (0) target = $region33
  $region32: #{gcn_forward.5} parent=0 // pred_region
    _
  $region33: #{gcn_forward.5} parent=0 // pred_fallthru
    _

</llo_original>
